<compile_context>
chip_gen: v7x
topology: tpu7x:2x2x1
jax: 0.10.0
libtpu: 0.0.40
codegen_flags: <defaults>
</compile_context>

<pallas_src>
import functools

import jax
import jax.numpy as jnp
from jax.experimental import pallas as pl
from jax.experimental.pallas import tpu as pltpu


def _round_up(x, m):
    return (x + m - 1) // m * m


def _choose_batch_tile(B, tb_cap=1024, target_steps=4):
    """Batch-tile size: large enough to amortize per-grid-step overhead,
    but split into >= target_steps steps (when the batch allows) so the
    1-D 'parallel' grid can be sharded across v7x's two TensorCores."""
    Bp8 = _round_up(B, 8)
    tb = _round_up(-(-Bp8 // target_steps), 8)   # aim for `target_steps` steps
    tb = max(128, tb)                            # don't bother below 128 rows
    tb = min(tb, tb_cap, Bp8)                    # cap; tiny batches -> one tile
    return _round_up(tb, 8)


def _encdec_kernel(tau, hard,
                   x_ref, noise_ref,
                   w1_ref, w2_ref, w3_ref, w4_ref, w5_ref, w6_ref,
                   bias_ref,
                   o_ref):
    inv_tau = jnp.float32(1.0 / tau)

    # Packed biases: one (8, 64) f32 tile; static slices are free.
    bias = bias_ref[...]
    b1 = bias[0:1, :]        # (1, 64)
    b2 = bias[1:2, :32]      # (1, 32)
    b3 = bias[2:3, :32]      # (1, 32)
    b4 = bias[3:4, :32]      # (1, 32)
    b5 = bias[4:5, :]        # (1, 64)
    b6 = bias[5:6, :]        # (1, 64)

    def dense(a_bf16, w_ref, b_f32, act):
        # bf16 operands, f32 MXU accumulation; bias/tanh in f32.
        h = jnp.dot(a_bf16, w_ref[...],
                    preferred_element_type=jnp.float32) + b_f32
        return jnp.tanh(h) if act else h

    x = x_ref[...].astype(jnp.bfloat16)

    # ---- encoder ----
    h = dense(x, w1_ref, b1, act=True).astype(jnp.bfloat16)
    h = dense(h, w2_ref, b2, act=True).astype(jnp.bfloat16)
    logits = dense(h, w3_ref, b3, act=False)                 # f32, (tb, 32)

    # ---- gumbel-sigmoid reparameterization ----
    # noise = g1 - g2 with g1,g2 ~ Gumbel(0,1)  <=>  noise ~ Logistic(0,1),
    # sampled host-side and streamed in.
    y = (logits + noise_ref[...]) * inv_tau
    if hard:
        # sigmoid(y) > 0.5  <=>  y > 0 ; skip the transcendental entirely.
        z = (y > 0).astype(jnp.bfloat16)
    else:
        z = jax.nn.sigmoid(y).astype(jnp.bfloat16)

    # ---- decoder ----
    d = dense(z, w4_ref, b4, act=True).astype(jnp.bfloat16)
    d = dense(d, w5_ref, b5, act=True).astype(jnp.bfloat16)
    out = dense(d, w6_ref, b6, act=False)                    # f32, (tb, 64)

    o_ref[...] = out.astype(o_ref.dtype)


def encoder_decoder_forward(x, params, key, *, tau=1.0, hard=False, tb_cap=1024):
    """x: [B, 64] f32; params: 12-tuple (w1,b1,...,w6,b6) with w as [in,out],
    b as [out]; key: jax PRNG key used for the gumbel-sigmoid noise."""
    B, D_in = x.shape
    assert D_in == 64
    (w1, b1, w2, b2, w3, b3, w4, b4, w5, b5, w6, b6) = params

    tb = _choose_batch_tile(B, tb_cap=tb_cap)
    Bp = _round_up(B, tb)

    # Single Logistic(0,1) draw per logit element (== g1 - g2 of two Gumbels).
    noise = jax.random.logistic(key, (B, 32), jnp.float32)

    if Bp != B:
        pad = ((0, Bp - B), (0, 0))
        x = jnp.pad(x, pad)
        noise = jnp.pad(noise, pad)

    # bf16 weights (f32 accumulation happens inside the kernel's jnp.dot).
    w1b, w2b, w3b, w4b, w5b, w6b = (
        w.astype(jnp.bfloat16) for w in (w1, w2, w3, w4, w5, w6))

    # Pack the six tiny biases into one (8, 64) f32 tile.
    bias_pack = jnp.zeros((8, 64), jnp.float32)
    bias_pack = bias_pack.at[0, :64].set(b1.reshape(-1))
    bias_pack = bias_pack.at[1, :32].set(b2.reshape(-1))
    bias_pack = bias_pack.at[2, :32].set(b3.reshape(-1))
    bias_pack = bias_pack.at[3, :32].set(b4.reshape(-1))
    bias_pack = bias_pack.at[4, :64].set(b5.reshape(-1))
    bias_pack = bias_pack.at[5, :64].set(b6.reshape(-1))

    kernel = functools.partial(_encdec_kernel, float(tau), bool(hard))
    weight_spec = lambda shape: pl.BlockSpec(shape, lambda i: (0, 0))

    # Advisory cost estimate (bf16 matmuls, f32 accumulation).
    flops = 2 * Bp * (64 * 64 + 64 * 32 + 32 * 32 + 32 * 32 + 32 * 64 + 64 * 64)
    transcendentals = Bp * (64 + 32 + 32 + 64) + (0 if hard else Bp * 32)
    weight_bytes = 2 * (64 * 64 + 64 * 32 + 32 * 32 + 32 * 32 + 32 * 64 + 64 * 64)
    bytes_accessed = (Bp * 64 * 4        # x in
                      + Bp * 32 * 4      # logistic noise in
                      + Bp * 64 * 4      # out
                      + weight_bytes + 8 * 64 * 4)

    out = pl.pallas_call(
        kernel,
        out_shape=jax.ShapeDtypeStruct((Bp, 64), jnp.float32),
        grid_spec=pltpu.PrefetchScalarGridSpec(
            num_scalar_prefetch=0,
            grid=(Bp // tb,),
            in_specs=[
                pl.BlockSpec((tb, 64), lambda i: (i, 0)),    # x
                pl.BlockSpec((tb, 32), lambda i: (i, 0)),    # logistic noise
                weight_spec((64, 64)),                       # enc L1 w
                weight_spec((64, 32)),                       # enc L2 w
                weight_spec((32, 32)),                       # enc L3 w
                weight_spec((32, 32)),                       # dec L1 w
                weight_spec((32, 64)),                       # dec L2 w
                weight_spec((64, 64)),                       # dec L3 w
                weight_spec((8, 64)),                        # packed biases
            ],
            out_specs=pl.BlockSpec((tb, 64), lambda i: (i, 0)),
        ),
        compiler_params=pltpu.CompilerParams(
            dimension_semantics=("parallel",)),
        cost_estimate=pl.CostEstimate(
            flops=flops,
            transcendentals=transcendentals,
            bytes_accessed=bytes_accessed),
    )(x, noise, w1b, w2b, w3b, w4b, w5b, w6b, bias_pack)

    return out[:B]


def init_params(key):
    """PyTorch Linear default init: U(-1/sqrt(fan_in), 1/sqrt(fan_in)).
    Weights stored as [in, out], biases as [out]."""
    dims = [(64, 64), (64, 32), (32, 32),   # encoder
            (32, 32), (32, 64), (64, 64)]   # decoder
    params = []
    for (fan_in, fan_out) in dims:
        key, kw, kb = jax.random.split(key, 3)
        bound = 1.0 / jnp.sqrt(jnp.float32(fan_in))
        w = jax.random.uniform(kw, (fan_in, fan_out), jnp.float32, -bound, bound)
        b = jax.random.uniform(kb, (fan_out,), jnp.float32, -bound, bound)
        params += [w, b]
    return tuple(params)


def _reference_forward(x, params, key, *, tau=1.0, hard=False):
    """Pure-JAX f32 reference with the SAME noise draw as the kernel wrapper."""
    (w1, b1, w2, b2, w3, b3, w4, b4, w5, b5, w6, b6) = params
    h = jnp.tanh(x @ w1 + b1)
    h = jnp.tanh(h @ w2 + b2)
    logits = h @ w3 + b3
    noise = jax.random.logistic(key, (x.shape[0], 32), jnp.float32)
    y = (logits + noise) / tau
    z = (y > 0).astype(jnp.float32) if hard else jax.nn.sigmoid(y)
    d = jnp.tanh(z @ w4 + b4)
    d = jnp.tanh(d @ w5 + b5)
    return d @ w6 + b6


if __name__ == "__main__":
    key = jax.random.PRNGKey(0)
    k_param, k_x, k_noise = jax.random.split(key, 3)

    B = 8
    x = jax.random.normal(k_x, (B, 64), jnp.float32)
    params = init_params(k_param)

    # soft (default) path
    out = encoder_decoder_forward(x, params, k_noise, tau=1.0, hard=False)
    jax.block_until_ready(out)
    assert out.shape == (B, 64) and out.dtype == jnp.float32
    assert bool(jnp.all(jnp.isfinite(out)))

    # numerical check vs f32 reference (bf16 matmul operands -> loose tolerance)
    ref = _reference_forward(x, params, k_noise, tau=1.0, hard=False)
    assert bool(jnp.allclose(out, ref, rtol=5e-2, atol=5e-2)), \
        float(jnp.max(jnp.abs(out - ref)))

    # hard (straight-through) forward path
    out_hard = encoder_decoder_forward(x, params, k_noise, tau=1.0, hard=True)
    jax.block_until_ready(out_hard)
    assert out_hard.shape == (B, 64)
    assert bool(jnp.all(jnp.isfinite(out_hard)))

    print("KERNEL_OK")
</pallas_src>

<mosaic_0001>
module attributes {stable_mosaic.version = 11 : i64} {
  func.func @_encdec_kernel(%arg0: i32, %arg1: memref<8x64xf32, #tpu.memory_space<vmem>>, %arg2: memref<8x32xf32, #tpu.memory_space<vmem>>, %arg3: memref<64x64xbf16, #tpu.memory_space<vmem>>, %arg4: memref<64x32xbf16, #tpu.memory_space<vmem>>, %arg5: memref<32x32xbf16, #tpu.memory_space<vmem>>, %arg6: memref<32x32xbf16, #tpu.memory_space<vmem>>, %arg7: memref<32x64xbf16, #tpu.memory_space<vmem>>, %arg8: memref<64x64xbf16, #tpu.memory_space<vmem>>, %arg9: memref<8x64xf32, #tpu.memory_space<vmem>>, %arg10: memref<8x64xf32, #tpu.memory_space<vmem>>) attributes {dimension_semantics = [#tpu.dimension_semantics<parallel>], iteration_bounds = array<i64: 1>, scalar_prefetch = 0 : i64, scratch_operands = 0 : i64, tpu.core_type = #tpu.core_type<tc>, window_params = [{transform_indices = @transform_0, window_bounds = array<i64: 8, 64>}, {transform_indices = @transform_1, window_bounds = array<i64: 8, 32>}, {pipeline_mode = #tpu.pipeline_mode<synchronous>, transform_indices = @transform_2, window_bounds = array<i64: 64, 64>}, {pipeline_mode = #tpu.pipeline_mode<synchronous>, transform_indices = @transform_3, window_bounds = array<i64: 64, 32>}, {pipeline_mode = #tpu.pipeline_mode<synchronous>, transform_indices = @transform_4, window_bounds = array<i64: 32, 32>}, {pipeline_mode = #tpu.pipeline_mode<synchronous>, transform_indices = @transform_5, window_bounds = array<i64: 32, 32>}, {pipeline_mode = #tpu.pipeline_mode<synchronous>, transform_indices = @transform_6, window_bounds = array<i64: 32, 64>}, {pipeline_mode = #tpu.pipeline_mode<synchronous>, transform_indices = @transform_7, window_bounds = array<i64: 64, 64>}, {pipeline_mode = #tpu.pipeline_mode<synchronous>, transform_indices = @transform_8, window_bounds = array<i64: 8, 64>}, {transform_indices = @transform_9, window_bounds = array<i64: 8, 64>}]} {
    %c0 = arith.constant 0 : index
    %c0_0 = arith.constant 0 : index
    %0 = vector.load %arg9[%c0, %c0_0] : memref<8x64xf32, #tpu.memory_space<vmem>>, vector<8x64xf32>
    %1 = vector.extract_strided_slice %0 {offsets = [0, 0], sizes = [1, 64], strides = [1, 1]} : vector<8x64xf32> to vector<1x64xf32>
    %2 = vector.extract_strided_slice %0 {offsets = [1, 0], sizes = [1, 32], strides = [1, 1]} : vector<8x64xf32> to vector<1x32xf32>
    %3 = vector.extract_strided_slice %0 {offsets = [2, 0], sizes = [1, 32], strides = [1, 1]} : vector<8x64xf32> to vector<1x32xf32>
    %4 = vector.extract_strided_slice %0 {offsets = [3, 0], sizes = [1, 32], strides = [1, 1]} : vector<8x64xf32> to vector<1x32xf32>
    %5 = vector.extract_strided_slice %0 {offsets = [4, 0], sizes = [1, 64], strides = [1, 1]} : vector<8x64xf32> to vector<1x64xf32>
    %6 = vector.extract_strided_slice %0 {offsets = [5, 0], sizes = [1, 64], strides = [1, 1]} : vector<8x64xf32> to vector<1x64xf32>
    %c0_1 = arith.constant 0 : index
    %c0_2 = arith.constant 0 : index
    %7 = vector.load %arg1[%c0_1, %c0_2] : memref<8x64xf32, #tpu.memory_space<vmem>>, vector<8x64xf32>
    %8 = arith.truncf %7 : vector<8x64xf32> to vector<8x64xbf16>
    %c0_3 = arith.constant 0 : index
    %c0_4 = arith.constant 0 : index
    %9 = vector.load %arg3[%c0_3, %c0_4] : memref<64x64xbf16, #tpu.memory_space<vmem>>, vector<64x64xbf16>
    %cst = arith.constant dense<0.000000e+00> : vector<8x64xf32>
    %10 = tpu.matmul %8, %9, %cst {dimension_numbers = #tpu.dot_dimension_numbers<[1], [0], [0], [1], [0, 0, 1, 1], [], []>} : vector<8x64xbf16>, vector<64x64xbf16>, vector<8x64xf32> -> vector<8x64xf32>
    %11 = vector.broadcast %1 : vector<1x64xf32> to vector<8x64xf32>
    %12 = arith.addf %10, %11 : vector<8x64xf32>
    %13 = math.tanh %12 : vector<8x64xf32>
    %14 = arith.truncf %13 : vector<8x64xf32> to vector<8x64xbf16>
    %c0_5 = arith.constant 0 : index
    %c0_6 = arith.constant 0 : index
    %15 = vector.load %arg4[%c0_5, %c0_6] : memref<64x32xbf16, #tpu.memory_space<vmem>>, vector<64x32xbf16>
    %cst_7 = arith.constant dense<0.000000e+00> : vector<8x32xf32>
    %16 = tpu.matmul %14, %15, %cst_7 {dimension_numbers = #tpu.dot_dimension_numbers<[1], [0], [0], [1], [0, 0, 1, 1], [], []>} : vector<8x64xbf16>, vector<64x32xbf16>, vector<8x32xf32> -> vector<8x32xf32>
    %17 = vector.broadcast %2 : vector<1x32xf32> to vector<8x32xf32>
    %18 = arith.addf %16, %17 : vector<8x32xf32>
    %19 = math.tanh %18 : vector<8x32xf32>
    %20 = arith.truncf %19 : vector<8x32xf32> to vector<8x32xbf16>
    %c0_8 = arith.constant 0 : index
    %c0_9 = arith.constant 0 : index
    %21 = vector.load %arg5[%c0_8, %c0_9] : memref<32x32xbf16, #tpu.memory_space<vmem>>, vector<32x32xbf16>
    %cst_10 = arith.constant dense<0.000000e+00> : vector<8x32xf32>
    %22 = tpu.matmul %20, %21, %cst_10 {dimension_numbers = #tpu.dot_dimension_numbers<[1], [0], [0], [1], [0, 0, 1, 1], [], []>} : vector<8x32xbf16>, vector<32x32xbf16>, vector<8x32xf32> -> vector<8x32xf32>
    %23 = vector.broadcast %3 : vector<1x32xf32> to vector<8x32xf32>
    %24 = arith.addf %22, %23 : vector<8x32xf32>
    %c0_11 = arith.constant 0 : index
    %c0_12 = arith.constant 0 : index
    %25 = vector.load %arg2[%c0_11, %c0_12] : memref<8x32xf32, #tpu.memory_space<vmem>>, vector<8x32xf32>
    %26 = arith.addf %24, %25 : vector<8x32xf32>
    %cst_13 = arith.constant 1.000000e+00 : f32
    %27 = vector.broadcast %cst_13 : f32 to vector<8x32xf32>
    %28 = arith.mulf %26, %27 : vector<8x32xf32>
    %29 = arith.negf %28 : vector<8x32xf32>
    %30 = math.exp %29 : vector<8x32xf32>
    %cst_14 = arith.constant 1.000000e+00 : f32
    %31 = vector.broadcast %cst_14 : f32 to vector<8x32xf32>
    %32 = arith.addf %31, %30 : vector<8x32xf32>
    %33 = arith.divf %31, %32 : vector<8x32xf32>
    %34 = arith.truncf %33 : vector<8x32xf32> to vector<8x32xbf16>
    %c0_15 = arith.constant 0 : index
    %c0_16 = arith.constant 0 : index
    %35 = vector.load %arg6[%c0_15, %c0_16] : memref<32x32xbf16, #tpu.memory_space<vmem>>, vector<32x32xbf16>
    %cst_17 = arith.constant dense<0.000000e+00> : vector<8x32xf32>
    %36 = tpu.matmul %34, %35, %cst_17 {dimension_numbers = #tpu.dot_dimension_numbers<[1], [0], [0], [1], [0, 0, 1, 1], [], []>} : vector<8x32xbf16>, vector<32x32xbf16>, vector<8x32xf32> -> vector<8x32xf32>
    %37 = vector.broadcast %4 : vector<1x32xf32> to vector<8x32xf32>
    %38 = arith.addf %36, %37 : vector<8x32xf32>
    %39 = math.tanh %38 : vector<8x32xf32>
    %40 = arith.truncf %39 : vector<8x32xf32> to vector<8x32xbf16>
    %c0_18 = arith.constant 0 : index
    %c0_19 = arith.constant 0 : index
    %41 = vector.load %arg7[%c0_18, %c0_19] : memref<32x64xbf16, #tpu.memory_space<vmem>>, vector<32x64xbf16>
    %cst_20 = arith.constant dense<0.000000e+00> : vector<8x64xf32>
    %42 = tpu.matmul %40, %41, %cst_20 {dimension_numbers = #tpu.dot_dimension_numbers<[1], [0], [0], [1], [0, 0, 1, 1], [], []>} : vector<8x32xbf16>, vector<32x64xbf16>, vector<8x64xf32> -> vector<8x64xf32>
    %43 = vector.broadcast %5 : vector<1x64xf32> to vector<8x64xf32>
    %44 = arith.addf %42, %43 : vector<8x64xf32>
    %45 = math.tanh %44 : vector<8x64xf32>
    %46 = arith.truncf %45 : vector<8x64xf32> to vector<8x64xbf16>
    %c0_21 = arith.constant 0 : index
    %c0_22 = arith.constant 0 : index
    %47 = vector.load %arg8[%c0_21, %c0_22] : memref<64x64xbf16, #tpu.memory_space<vmem>>, vector<64x64xbf16>
    %cst_23 = arith.constant dense<0.000000e+00> : vector<8x64xf32>
    %48 = tpu.matmul %46, %47, %cst_23 {dimension_numbers = #tpu.dot_dimension_numbers<[1], [0], [0], [1], [0, 0, 1, 1], [], []>} : vector<8x64xbf16>, vector<64x64xbf16>, vector<8x64xf32> -> vector<8x64xf32>
    %49 = vector.broadcast %6 : vector<1x64xf32> to vector<8x64xf32>
    %50 = arith.addf %48, %49 : vector<8x64xf32>
    %c0_24 = arith.constant 0 : index
    %c0_25 = arith.constant 0 : index
    %51 = vector.load %arg10[%c0_24, %c0_25] : memref<8x64xf32, #tpu.memory_space<vmem>>, vector<8x64xf32>
    tpu.vector_store %arg10[%c0_24, %c0_25], %50 {strides = array<i32>} : memref<8x64xf32, #tpu.memory_space<vmem>>, vector<8x64xf32>,
    return
  }
  func.func @transform_0(%arg0: i32) -> (i32, i32) {
    %c0_i32 = arith.constant 0 : i32
    %c0_i32_0 = arith.constant 0 : i32
    return %arg0, %c0_i32 : i32, i32
  }
  func.func @transform_1(%arg0: i32) -> (i32, i32) {
    %c0_i32 = arith.constant 0 : i32
    %c0_i32_0 = arith.constant 0 : i32
    return %arg0, %c0_i32 : i32, i32
  }
  func.func @transform_2(%arg0: i32) -> (i32, i32) {
    %c0_i32 = arith.constant 0 : i32
    %c0_i32_0 = arith.constant 0 : i32
    %c0_i32_1 = arith.constant 0 : i32
    return %c0_i32, %c0_i32_0 : i32, i32
  }
  func.func @transform_3(%arg0: i32) -> (i32, i32) {
    %c0_i32 = arith.constant 0 : i32
    %c0_i32_0 = arith.constant 0 : i32
    %c0_i32_1 = arith.constant 0 : i32
    return %c0_i32, %c0_i32_0 : i32, i32
  }
  func.func @transform_4(%arg0: i32) -> (i32, i32) {
    %c0_i32 = arith.constant 0 : i32
    %c0_i32_0 = arith.constant 0 : i32
    %c0_i32_1 = arith.constant 0 : i32
    return %c0_i32, %c0_i32_0 : i32, i32
  }
  func.func @transform_5(%arg0: i32) -> (i32, i32) {
    %c0_i32 = arith.constant 0 : i32
    %c0_i32_0 = arith.constant 0 : i32
    %c0_i32_1 = arith.constant 0 : i32
    return %c0_i32, %c0_i32_0 : i32, i32
  }
  func.func @transform_6(%arg0: i32) -> (i32, i32) {
    %c0_i32 = arith.constant 0 : i32
    %c0_i32_0 = arith.constant 0 : i32
    %c0_i32_1 = arith.constant 0 : i32
    return %c0_i32, %c0_i32_0 : i32, i32
  }
  func.func @transform_7(%arg0: i32) -> (i32, i32) {
    %c0_i32 = arith.constant 0 : i32
    %c0_i32_0 = arith.constant 0 : i32
    %c0_i32_1 = arith.constant 0 : i32
    return %c0_i32, %c0_i32_0 : i32, i32
  }
  func.func @transform_8(%arg0: i32) -> (i32, i32) {
    %c0_i32 = arith.constant 0 : i32
    %c0_i32_0 = arith.constant 0 : i32
    %c0_i32_1 = arith.constant 0 : i32
    return %c0_i32, %c0_i32_0 : i32, i32
  }
  func.func @transform_9(%arg0: i32) -> (i32, i32) {
    %c0_i32 = arith.constant 0 : i32
    %c0_i32_0 = arith.constant 0 : i32
    return %arg0, %c0_i32 : i32, i32
  }
}

</mosaic_0001>

<llo_original>
// kernel: tpu_custom_call.1
$region0: #{tpu_custom_call.1}
  #allocation0 [shape = 'u32[]', space=smem, size = 0x4, offset = 0x4, fixed_abs, tag = 'smem constant byte address 0x4 - core index']
  #allocation1 [shape = 'u32[144,128]{1,0:T(1,128)}', space=vmem, size = 0x12000, scoped, tag = 'internal scratch']
  %s0 = inlined_call_operand.hbm [shape: f32[8,64], index: 0, kind: input, shape index: {}]
  %s1 = inlined_call_operand.hbm [shape: f32[8,32], index: 1, kind: input, shape index: {}]
  %s2 = inlined_call_operand.vmem [shape: bf16[64,64], index: 2, kind: input, shape index: {}]
  %s3 = inlined_call_operand.vmem [shape: bf16[64,32], index: 3, kind: input, shape index: {}]
  %s4 = inlined_call_operand.hbm [shape: bf16[32,32], index: 4, kind: input, shape index: {}]
  %s5 = inlined_call_operand.hbm [shape: bf16[32,32], index: 5, kind: input, shape index: {}]
  %s6 = inlined_call_operand.hbm [shape: bf16[32,64], index: 6, kind: input, shape index: {}]
  %s7 = inlined_call_operand.vmem [shape: bf16[64,64], index: 7, kind: input, shape index: {}]
  %s8 = inlined_call_operand.vmem [shape: f32[8,64], index: 8, kind: input, shape index: {}]
  %s9 = inlined_call_operand.hbm [shape: f32[8,64], index: 9, kind: output, shape index: {}]
  %s10 = sld [smem:[#allocation0]]
  $region66: #{tpu_custom_call.1} parent=0
    _
  %s12 = ssub.s32 1, %s10
  %s13 = scalar_select 0, %s12, %s10
  $region1: #{tpu_custom_call.1} parent=0
    #allocation2 [shape = 'u8[4096]{0}', space=vmem, size = 0x1000, scoped, tag = 'input window, operand 0, single buffered']
    #allocation3 [shape = 's32[1]{0}', space=sflag, size = 0x4, scoped, tag = 'scoped memory for tpu_custom_call.1']
    #allocation4 [shape = 's32[1]{0}', space=sflag, size = 0x4, scoped, tag = 'scoped memory for tpu_custom_call.1']
    #allocation5 [shape = 'u8[4096]{0}', space=vmem, size = 0x1000, scoped, tag = 'input window, operand 1, single buffered']
    #allocation6 [shape = 's32[1]{0}', space=sflag, size = 0x4, scoped, tag = 'scoped memory for tpu_custom_call.1']
    #allocation7 [shape = 'u8[8192]{0}', space=vmem, size = 0x2000, scoped, tag = 'input window, operand 4, single buffered']
    #allocation8 [shape = 'u8[8192]{0}', space=vmem, size = 0x2000, scoped, tag = 'input window, operand 5, single buffered']
    #allocation9 [shape = 's32[1]{0}', space=sflag, size = 0x4, scoped, tag = 'scoped memory for tpu_custom_call.1']
    #allocation10 [shape = 'u8[8192]{0}', space=vmem, size = 0x2000, scoped, tag = 'input window, operand 6, single buffered']
    #allocation11 [shape = 'u8[4096]{0}', space=vmem, size = 0x1000, scoped, tag = 'output window, operand 0, single buffered']
    %14 = vsyncpa [#allocation3], 0
    %15 = vsyncpa [#allocation6], 0
    %16 = vsyncpa [#allocation9], 0
    %17 = vsyncpa [#allocation4], 0
    // Predicated region
    $region2: #{tpu_custom_call.1} parent=1 // pred_check
      _
    $region3: #{tpu_custom_call.1} parent=1 // pred_check_branch
      %19 = sbr.rel (0) target = $region5
    $region4: #{tpu_custom_call.1} parent=1 // pred_region
      %s21 = ssub.s32 128, 128
      %22 = vsyncadd [#allocation3], %s21
      %s24 = sshll.u32 [#allocation2], 4
      %s25 = int_to_ptr.vmem [resolvable:$true] %s24
      %27 = dma.hbm_to_vmem [thread:$0]  %s0, 128, %s25, [#allocation3]
    $region5: #{tpu_custom_call.1} parent=1 // pred_fallthru
      _
    // Predicated region
    $region6: #{tpu_custom_call.1} parent=1 // pred_check
      _
    $region7: #{tpu_custom_call.1} parent=1 // pred_check_branch
      %29 = sbr.rel (0) target = $region9
    $region8: #{tpu_custom_call.1} parent=1 // pred_region
      %s31 = ssub.s32 128, 128
      %32 = vsyncadd [#allocation6], %s31
      %s34 = sshll.u32 [#allocation5], 4
      %s35 = int_to_ptr.vmem [resolvable:$true] %s34
      %37 = dma.hbm_to_vmem [thread:$0]  %s1, 128, %s35, [#allocation6]
    $region9: #{tpu_custom_call.1} parent=1 // pred_fallthru
      _
    // Predicated region
    $region10: #{tpu_custom_call.1} parent=1 // pred_check
      _
    $region11: #{tpu_custom_call.1} parent=1 // pred_check_branch
      %39 = sbr.rel (0) target = $region13
    $region12: #{tpu_custom_call.1} parent=1 // pred_region
      _
    $region13: #{tpu_custom_call.1} parent=1 // pred_fallthru
      _
    // Predicated region
    $region14: #{tpu_custom_call.1} parent=1 // pred_check
      _
    $region15: #{tpu_custom_call.1} parent=1 // pred_check_branch
      %41 = sbr.rel (0) target = $region17
    $region16: #{tpu_custom_call.1} parent=1 // pred_region
      _
    $region17: #{tpu_custom_call.1} parent=1 // pred_fallthru
      _
    // Predicated region
    $region18: #{tpu_custom_call.1} parent=1 // pred_check
      _
    $region19: #{tpu_custom_call.1} parent=1 // pred_check_branch
      %43 = sbr.rel (0) target = $region21
    $region20: #{tpu_custom_call.1} parent=1 // pred_region
      %s45 = ssub.s32 256, 256
      %46 = vsyncadd [#allocation6], %s45
      %s47 = sshll.u32 [#allocation7], 4
      %s48 = int_to_ptr.vmem [resolvable:$true] %s47
      %53 = dma.hbm_to_vmem [thread:$0]  %s4, 256, %s48, [#allocation6], 64, 64, 4
    $region21: #{tpu_custom_call.1} parent=1 // pred_fallthru
      _
    // Predicated region
    $region22: #{tpu_custom_call.1} parent=1 // pred_check
      _
    $region23: #{tpu_custom_call.1} parent=1 // pred_check_branch
      %55 = sbr.rel (0) target = $region25
    $region24: #{tpu_custom_call.1} parent=1 // pred_region
      %s57 = ssub.s32 256, 256
      %58 = vsyncadd [#allocation9], %s57
      %s59 = sshll.u32 [#allocation8], 4
      %s60 = int_to_ptr.vmem [resolvable:$true] %s59
      %65 = dma.hbm_to_vmem [thread:$0]  %s5, 256, %s60, [#allocation9], 64, 64, 4
    $region25: #{tpu_custom_call.1} parent=1 // pred_fallthru
      _
    // Predicated region
    $region26: #{tpu_custom_call.1} parent=1 // pred_check
      _
    $region27: #{tpu_custom_call.1} parent=1 // pred_check_branch
      %67 = sbr.rel (0) target = $region29
    $region28: #{tpu_custom_call.1} parent=1 // pred_region
      %s69 = ssub.s32 256, 256
      %70 = vsyncadd [#allocation9], %s69
      %s71 = sshll.u32 [#allocation10], 4
      %s72 = int_to_ptr.vmem [resolvable:$true] %s71
      %77 = dma.hbm_to_vmem [thread:$0]  %s6, 256, %s72, [#allocation9], 64, 64, 4
    $region29: #{tpu_custom_call.1} parent=1 // pred_fallthru
      _
    // Predicated region
    $region30: #{tpu_custom_call.1} parent=1 // pred_check
      _
    $region31: #{tpu_custom_call.1} parent=1 // pred_check_branch
      %79 = sbr.rel (0) target = $region33
    $region32: #{tpu_custom_call.1} parent=1 // pred_region
      _
    $region33: #{tpu_custom_call.1} parent=1 // pred_fallthru
      _
    // Predicated region
    $region34: #{tpu_custom_call.1} parent=1 // pred_check
      _
    $region35: #{tpu_custom_call.1} parent=1 // pred_check_branch
      %81 = sbr.rel (0) target = $region37
    $region36: #{tpu_custom_call.1} parent=1 // pred_region
      _
    $region37: #{tpu_custom_call.1} parent=1 // pred_fallthru
      _
    // Predicated region
    $region38: #{tpu_custom_call.1} parent=1 // pred_check
      _
    $region39: #{tpu_custom_call.1} parent=1 // pred_check_branch
      %83 = sbr.rel (0) target = $region41
    $region40: #{tpu_custom_call.1} parent=1 // pred_region
      %84 = dma.done [#allocation3], 128
    $region41: #{tpu_custom_call.1} parent=1 // pred_fallthru
      _
    // Predicated region
    $region42: #{tpu_custom_call.1} parent=1 // pred_check
      _
    $region43: #{tpu_custom_call.1} parent=1 // pred_check_branch
      %86 = sbr.rel (0) target = $region45
    $region44: #{tpu_custom_call.1} parent=1 // pred_region
      %87 = dma.done [#allocation6], 128
    $region45: #{tpu_custom_call.1} parent=1 // pred_fallthru
      _
    // Predicated region
    $region46: #{tpu_custom_call.1} parent=1 // pred_check
      _
    $region47: #{tpu_custom_call.1} parent=1 // pred_check_branch
      %89 = sbr.rel (0) target = $region49
    $region48: #{tpu_custom_call.1} parent=1 // pred_region
      %90 = dma.done [#allocation6], 256
    $region49: #{tpu_custom_call.1} parent=1 // pred_fallthru
      _
    // Predicated region
    $region50: #{tpu_custom_call.1} parent=1 // pred_check
      _
    $region51: #{tpu_custom_call.1} parent=1 // pred_check_branch
      %92 = sbr.rel (0) target = $region53
    $region52: #{tpu_custom_call.1} parent=1 // pred_region
      %93 = dma.done [#allocation9], 256
    $region53: #{tpu_custom_call.1} parent=1 // pred_fallthru
      _
    // Predicated region
    $region54: #{tpu_custom_call.1} parent=1 // pred_check
      _
    $region55: #{tpu_custom_call.1} parent=1 // pred_check_branch
      %95 = sbr.rel (0) target = $region57
    $region56: #{tpu_custom_call.1} parent=1 // pred_region
      %96 = dma.done [#allocation9], 256
    $region57: #{tpu_custom_call.1} parent=1 // pred_fallthru
      _
    %v98 = vld [vmem:[%s8] sm:$0xff]
    %v99 = vld [vmem:[#allocation2] sm:$0xff]
    %v100 = vpack.c.bf16 %v99, %v99
    %v101 = vld [vmem:[%s2] sm:$0xf]
    %v102 = vld [vmem:[%s2 + $0x4] sm:$0xf]
    %v103 = vld [vmem:[%s2 + $0x8] sm:$0xf]
    %v104 = vld [vmem:[%s2 + $0xc] sm:$0xf]
    %v105 = vld [vmem:[%s2 + $0x10] sm:$0xf]
    %v106 = vld [vmem:[%s2 + $0x14] sm:$0xf]
    %v107 = vld [vmem:[%s2 + $0x18] sm:$0xf]
    %v108 = vld [vmem:[%s2 + $0x1c] sm:$0xf]
    %v109 = vlaneseq
    %v110 = vshrl.u32 %v109, 7
    %v111 = vsub.s32 0, %v110
    %v112 = vrot.slane %v98, %v111
    %v121 = vunpack.c.l.b16 %v101
    %v122 = vunpack.c.l.b16 %v102
    %v123 = vunpack.c.l.b16 %v103
    %v124 = vunpack.c.l.b16 %v104
    %v125 = vunpack.c.l.b16 %v105
    %v126 = vunpack.c.l.b16 %v106
    %v127 = vunpack.c.l.b16 %v107
    %v128 = vunpack.c.l.b16 %v108
    %v129 = vpack.c.b16 %v122, %v121
    %v130 = vpack.c.b16 %v124, %v123
    %v131 = vpack.c.b16 %v126, %v125
    %v132 = vpack.c.b16 %v128, %v127
    %vm137 = vcmask 523264
    %v139 = vsel %vm137, %v100, 0
    %141 = vmatprep.subr.bf16.mxu0 0
    %142 = vmatpush1.bf16.msra.mxu0 %v129
    %143 = vmatprep.subr.bf16.mxu0 0
    %144 = vmatpush1.bf16.msra.mxu0 %v130
    %145 = vmatprep.subr.bf16.mxu0 0
    %146 = vmatpush1.bf16.msra.mxu0 %v131
    %147 = vmatprep.subr.bf16.mxu0 0
    %148 = vmatpush1.bf16.msra.mxu0 %v132
    %149 = vmatprep.subr.bf16.mxu0 0
    %150 = vmatpush1.bf16.msra.mxu0 0
    %151 = vmatprep.subr.bf16.mxu0 0
    %152 = vmatpush1.bf16.msra.mxu0 0
    %153 = vmatprep.subr.bf16.mxu0 0
    %154 = vmatpush1.bf16.msra.mxu0 0
    %155 = vmatprep.subr.bf16.mxu0 0
    %156 = vmatpush1.bf16.msra.mxu0 0
    %157 = vmatprep.subr.bf16.mxu0 0
    %158 = vmatpush1.bf16.msra.mxu0 0
    %159 = vmatprep.subr.bf16.mxu0 0
    %160 = vmatpush1.bf16.msra.mxu0 0
    %161 = vmatprep.subr.bf16.mxu0 0
    %162 = vmatpush1.bf16.msra.mxu0 0
    %163 = vmatprep.subr.bf16.mxu0 0
    %164 = vmatpush1.bf16.msra.mxu0 0
    %165 = vmatprep.subr.bf16.mxu0 0
    %166 = vmatpush1.bf16.msra.mxu0 0
    %167 = vmatprep.subr.bf16.mxu0 0
    %168 = vmatpush1.bf16.msra.mxu0 0
    %169 = vmatprep.subr.bf16.mxu0 0
    %170 = vmatpush1.bf16.msra.mxu0 0
    %171 = vmatprep.subr.bf16.mxu0 0
    %172 = vmatpush1.bf16.msra.mxu0 0
    %173 = vmatprep.mubr.bf16.mxu0 0
    %174 = vmatmul.mubr.bf16.gmra.mrb[0].mxu0 %v139
    %v175 = vpop.f32.mrb[0].mxu0
    %v176 = vadd.f32 %v112, %v175
    %v177 = vpop.f32.mrb[0].mxu0
    %v178 = vpop.f32.mrb[0].mxu0
    %v179 = vpop.f32.mrb[0].mxu0
    %180 = vdwg.mxu0
    %v181 = vtanh.pop %v176
    %v182 = vpack.c.bf16 %v181, %v181
    %v183 = vld [vmem:[%s3] sm:$0xf]
    %v184 = vld [vmem:[%s3 + $0x4] sm:$0xf]
    %v185 = vld [vmem:[%s3 + $0x8] sm:$0xf]
    %v186 = vld [vmem:[%s3 + $0xc] sm:$0xf]
    %v187 = vld [vmem:[%s3 + $0x10] sm:$0xf]
    %v188 = vld [vmem:[%s3 + $0x14] sm:$0xf]
    %v189 = vld [vmem:[%s3 + $0x18] sm:$0xf]
    %v190 = vld [vmem:[%s3 + $0x1c] sm:$0xf]
    %v191 = vlaneseq
    %v192 = vshrl.u32 %v191, 7
    %v193 = vsub.s32 1, %v192
    %v194 = vrot.slane %v98, %v193
    %v203 = vunpack.c.l.b16 %v183
    %v204 = vunpack.c.l.b16 %v184
    %v205 = vunpack.c.l.b16 %v185
    %v206 = vunpack.c.l.b16 %v186
    %v207 = vunpack.c.l.b16 %v187
    %v208 = vunpack.c.l.b16 %v188
    %v209 = vunpack.c.l.b16 %v189
    %v210 = vunpack.c.l.b16 %v190
    %v211 = vpack.c.b16 %v204, %v203
    %v212 = vpack.c.b16 %v206, %v205
    %v213 = vpack.c.b16 %v208, %v207
    %v214 = vpack.c.b16 %v210, %v209
    %v220 = vsel %vm137, %v182, 0
    %222 = vmatprep.subr.bf16.mxu0 0
    %223 = vmatpush1.bf16.msra.mxu0 %v211
    %224 = vmatprep.subr.bf16.mxu0 0
    %225 = vmatpush1.bf16.msra.mxu0 %v212
    %226 = vmatprep.subr.bf16.mxu0 0
    %227 = vmatpush1.bf16.msra.mxu0 %v213
    %228 = vmatprep.subr.bf16.mxu0 0
    %229 = vmatpush1.bf16.msra.mxu0 %v214
    %230 = vmatprep.subr.bf16.mxu0 0
    %231 = vmatpush1.bf16.msra.mxu0 0
    %232 = vmatprep.subr.bf16.mxu0 0
    %233 = vmatpush1.bf16.msra.mxu0 0
    %234 = vmatprep.subr.bf16.mxu0 0
    %235 = vmatpush1.bf16.msra.mxu0 0
    %236 = vmatprep.subr.bf16.mxu0 0
    %237 = vmatpush1.bf16.msra.mxu0 0
    %238 = vmatprep.subr.bf16.mxu0 0
    %239 = vmatpush1.bf16.msra.mxu0 0
    %240 = vmatprep.subr.bf16.mxu0 0
    %241 = vmatpush1.bf16.msra.mxu0 0
    %242 = vmatprep.subr.bf16.mxu0 0
    %243 = vmatpush1.bf16.msra.mxu0 0
    %244 = vmatprep.subr.bf16.mxu0 0
    %245 = vmatpush1.bf16.msra.mxu0 0
    %246 = vmatprep.subr.bf16.mxu0 0
    %247 = vmatpush1.bf16.msra.mxu0 0
    %248 = vmatprep.subr.bf16.mxu0 0
    %249 = vmatpush1.bf16.msra.mxu0 0
    %250 = vmatprep.subr.bf16.mxu0 0
    %251 = vmatpush1.bf16.msra.mxu0 0
    %252 = vmatprep.subr.bf16.mxu0 0
    %253 = vmatpush1.bf16.msra.mxu0 0
    %254 = vmatprep.mubr.bf16.mxu0 0
    %255 = vmatmul.mubr.bf16.gmra.mrb[0].mxu0 %v220
    %v256 = vpop.f32.mrb[0].mxu0
    %v257 = vadd.f32 %v194, %v256
    %v258 = vpop.f32.mrb[0].mxu0
    %v259 = vpop.f32.mrb[0].mxu0
    %v260 = vpop.f32.mrb[0].mxu0
    %261 = vdwg.mxu0
    %v262 = vtanh.pop %v257
    %v263 = vpack.c.bf16 %v262, %v262
    %v264 = vld [vmem:[#allocation7] sm:$0xf]
    %v265 = vld [vmem:[#allocation7 + $0x4] sm:$0xf]
    %v266 = vld [vmem:[#allocation7 + $0x8] sm:$0xf]
    %v267 = vld [vmem:[#allocation7 + $0xc] sm:$0xf]
    %v268 = vlaneseq
    %v269 = vshrl.u32 %v268, 7
    %v270 = vsub.s32 2, %v269
    %v271 = vrot.slane %v98, %v270
    %v276 = vunpack.c.l.b16 %v264
    %v277 = vunpack.c.l.b16 %v265
    %v278 = vunpack.c.l.b16 %v266
    %v279 = vunpack.c.l.b16 %v267
    %v280 = vpack.c.b16 %v277, %v276
    %v281 = vpack.c.b16 %v279, %v278
    %vm284 = vcmask 261120
    %v286 = vsel %vm284, %v263, 0
    %288 = vmatprep.subr.bf16.mxu0 0
    %289 = vmatpush1.bf16.msra.mxu0 %v280
    %290 = vmatprep.subr.bf16.mxu0 0
    %291 = vmatpush1.bf16.msra.mxu0 %v281
    %292 = vmatprep.subr.bf16.mxu0 0
    %293 = vmatpush1.bf16.msra.mxu0 0
    %294 = vmatprep.subr.bf16.mxu0 0
    %295 = vmatpush1.bf16.msra.mxu0 0
    %296 = vmatprep.subr.bf16.mxu0 0
    %297 = vmatpush1.bf16.msra.mxu0 0
    %298 = vmatprep.subr.bf16.mxu0 0
    %299 = vmatpush1.bf16.msra.mxu0 0
    %300 = vmatprep.subr.bf16.mxu0 0
    %301 = vmatpush1.bf16.msra.mxu0 0
    %302 = vmatprep.subr.bf16.mxu0 0
    %303 = vmatpush1.bf16.msra.mxu0 0
    %304 = vmatprep.subr.bf16.mxu0 0
    %305 = vmatpush1.bf16.msra.mxu0 0
    %306 = vmatprep.subr.bf16.mxu0 0
    %307 = vmatpush1.bf16.msra.mxu0 0
    %308 = vmatprep.subr.bf16.mxu0 0
    %309 = vmatpush1.bf16.msra.mxu0 0
    %310 = vmatprep.subr.bf16.mxu0 0
    %311 = vmatpush1.bf16.msra.mxu0 0
    %312 = vmatprep.subr.bf16.mxu0 0
    %313 = vmatpush1.bf16.msra.mxu0 0
    %314 = vmatprep.subr.bf16.mxu0 0
    %315 = vmatpush1.bf16.msra.mxu0 0
    %316 = vmatprep.subr.bf16.mxu0 0
    %317 = vmatpush1.bf16.msra.mxu0 0
    %318 = vmatprep.subr.bf16.mxu0 0
    %319 = vmatpush1.bf16.msra.mxu0 0
    %320 = vmatprep.mubr.bf16.mxu0 0
    %321 = vmatmul.mubr.bf16.gmra.mrb[0].mxu0 %v286
    %v322 = vpop.f32.mrb[0].mxu0
    %v323 = vadd.f32 %v271, %v322
    %v324 = vpop.f32.mrb[0].mxu0
    %v325 = vpop.f32.mrb[0].mxu0
    %v326 = vpop.f32.mrb[0].mxu0
    %327 = vdwg.mxu0
    %v328 = vld [vmem:[#allocation5] sm:$0xff]
    %v329 = vadd.f32 %v323, %v328
    %v330 = vxor.u32 %v329, 2147483648
    %v331 = vmul.f32 %v330, 1.442695
    %v332 = vpow.pop %v331
    %v333 = vadd.f32 %v332, 1.0
    %v334 = vrcp.pop %v333
    %v335 = vmul.f32 1.0, %v334
    %v336 = vpack.c.bf16 %v335, %v335
    %v337 = vld [vmem:[#allocation8] sm:$0xf]
    %v338 = vld [vmem:[#allocation8 + $0x4] sm:$0xf]
    %v339 = vld [vmem:[#allocation8 + $0x8] sm:$0xf]
    %v340 = vld [vmem:[#allocation8 + $0xc] sm:$0xf]
    %v341 = vlaneseq
    %v342 = vshrl.u32 %v341, 7
    %v343 = vsub.s32 3, %v342
    %v344 = vrot.slane %v98, %v343
    %v349 = vunpack.c.l.b16 %v337
    %v350 = vunpack.c.l.b16 %v338
    %v351 = vunpack.c.l.b16 %v339
    %v352 = vunpack.c.l.b16 %v340
    %v353 = vpack.c.b16 %v350, %v349
    %v354 = vpack.c.b16 %v352, %v351
    %v358 = vsel %vm284, %v336, 0
    %360 = vmatprep.subr.bf16.mxu0 0
    %361 = vmatpush1.bf16.msra.mxu0 %v353
    %362 = vmatprep.subr.bf16.mxu0 0
    %363 = vmatpush1.bf16.msra.mxu0 %v354
    %364 = vmatprep.subr.bf16.mxu0 0
    %365 = vmatpush1.bf16.msra.mxu0 0
    %366 = vmatprep.subr.bf16.mxu0 0
    %367 = vmatpush1.bf16.msra.mxu0 0
    %368 = vmatprep.subr.bf16.mxu0 0
    %369 = vmatpush1.bf16.msra.mxu0 0
    %370 = vmatprep.subr.bf16.mxu0 0
    %371 = vmatpush1.bf16.msra.mxu0 0
    %372 = vmatprep.subr.bf16.mxu0 0
    %373 = vmatpush1.bf16.msra.mxu0 0
    %374 = vmatprep.subr.bf16.mxu0 0
    %375 = vmatpush1.bf16.msra.mxu0 0
    %376 = vmatprep.subr.bf16.mxu0 0
    %377 = vmatpush1.bf16.msra.mxu0 0
    %378 = vmatprep.subr.bf16.mxu0 0
    %379 = vmatpush1.bf16.msra.mxu0 0
    %380 = vmatprep.subr.bf16.mxu0 0
    %381 = vmatpush1.bf16.msra.mxu0 0
    %382 = vmatprep.subr.bf16.mxu0 0
    %383 = vmatpush1.bf16.msra.mxu0 0
    %384 = vmatprep.subr.bf16.mxu0 0
    %385 = vmatpush1.bf16.msra.mxu0 0
    %386 = vmatprep.subr.bf16.mxu0 0
    %387 = vmatpush1.bf16.msra.mxu0 0
    %388 = vmatprep.subr.bf16.mxu0 0
    %389 = vmatpush1.bf16.msra.mxu0 0
    %390 = vmatprep.subr.bf16.mxu0 0
    %391 = vmatpush1.bf16.msra.mxu0 0
    %392 = vmatprep.mubr.bf16.mxu0 0
    %393 = vmatmul.mubr.bf16.gmra.mrb[0].mxu0 %v358
    %v394 = vpop.f32.mrb[0].mxu0
    %v395 = vadd.f32 %v344, %v394
    %v396 = vpop.f32.mrb[0].mxu0
    %v397 = vpop.f32.mrb[0].mxu0
    %v398 = vpop.f32.mrb[0].mxu0
    %399 = vdwg.mxu0
    %v400 = vtanh.pop %v395
    %v401 = vpack.c.bf16 %v400, %v400
    %v402 = vld [vmem:[#allocation10] sm:$0xf]
    %v403 = vld [vmem:[#allocation10 + $0x4] sm:$0xf]
    %v404 = vld [vmem:[#allocation10 + $0x8] sm:$0xf]
    %v405 = vld [vmem:[#allocation10 + $0xc] sm:$0xf]
    %v406 = vlaneseq
    %v407 = vshrl.u32 %v406, 7
    %v408 = vsub.s32 4, %v407
    %v409 = vrot.slane %v98, %v408
    %v414 = vunpack.c.l.b16 %v402
    %v415 = vunpack.c.l.b16 %v403
    %v416 = vunpack.c.l.b16 %v404
    %v417 = vunpack.c.l.b16 %v405
    %v418 = vpack.c.b16 %v415, %v414
    %v419 = vpack.c.b16 %v417, %v416
    %v423 = vsel %vm284, %v401, 0
    %425 = vmatprep.subr.bf16.mxu0 0
    %426 = vmatpush1.bf16.msra.mxu0 %v418
    %427 = vmatprep.subr.bf16.mxu0 0
    %428 = vmatpush1.bf16.msra.mxu0 %v419
    %429 = vmatprep.subr.bf16.mxu0 0
    %430 = vmatpush1.bf16.msra.mxu0 0
    %431 = vmatprep.subr.bf16.mxu0 0
    %432 = vmatpush1.bf16.msra.mxu0 0
    %433 = vmatprep.subr.bf16.mxu0 0
    %434 = vmatpush1.bf16.msra.mxu0 0
    %435 = vmatprep.subr.bf16.mxu0 0
    %436 = vmatpush1.bf16.msra.mxu0 0
    %437 = vmatprep.subr.bf16.mxu0 0
    %438 = vmatpush1.bf16.msra.mxu0 0
    %439 = vmatprep.subr.bf16.mxu0 0
    %440 = vmatpush1.bf16.msra.mxu0 0
    %441 = vmatprep.subr.bf16.mxu0 0
    %442 = vmatpush1.bf16.msra.mxu0 0
    %443 = vmatprep.subr.bf16.mxu0 0
    %444 = vmatpush1.bf16.msra.mxu0 0
    %445 = vmatprep.subr.bf16.mxu0 0
    %446 = vmatpush1.bf16.msra.mxu0 0
    %447 = vmatprep.subr.bf16.mxu0 0
    %448 = vmatpush1.bf16.msra.mxu0 0
    %449 = vmatprep.subr.bf16.mxu0 0
    %450 = vmatpush1.bf16.msra.mxu0 0
    %451 = vmatprep.subr.bf16.mxu0 0
    %452 = vmatpush1.bf16.msra.mxu0 0
    %453 = vmatprep.subr.bf16.mxu0 0
    %454 = vmatpush1.bf16.msra.mxu0 0
    %455 = vmatprep.subr.bf16.mxu0 0
    %456 = vmatpush1.bf16.msra.mxu0 0
    %457 = vmatprep.mubr.bf16.mxu0 0
    %458 = vmatmul.mubr.bf16.gmra.mrb[0].mxu0 %v423
    %v459 = vpop.f32.mrb[0].mxu0
    %v460 = vadd.f32 %v409, %v459
    %v461 = vpop.f32.mrb[0].mxu0
    %v462 = vpop.f32.mrb[0].mxu0
    %v463 = vpop.f32.mrb[0].mxu0
    %464 = vdwg.mxu0
    %v465 = vtanh.pop %v460
    %v466 = vpack.c.bf16 %v465, %v465
    %v467 = vld [vmem:[%s7] sm:$0xf]
    %v468 = vld [vmem:[%s7 + $0x4] sm:$0xf]
    %v469 = vld [vmem:[%s7 + $0x8] sm:$0xf]
    %v470 = vld [vmem:[%s7 + $0xc] sm:$0xf]
    %v471 = vld [vmem:[%s7 + $0x10] sm:$0xf]
    %v472 = vld [vmem:[%s7 + $0x14] sm:$0xf]
    %v473 = vld [vmem:[%s7 + $0x18] sm:$0xf]
    %v474 = vld [vmem:[%s7 + $0x1c] sm:$0xf]
    %v475 = vlaneseq
    %v476 = vshrl.u32 %v475, 7
    %v477 = vsub.s32 5, %v476
    %v478 = vrot.slane %v98, %v477
    %v487 = vunpack.c.l.b16 %v467
    %v488 = vunpack.c.l.b16 %v468
    %v489 = vunpack.c.l.b16 %v469
    %v490 = vunpack.c.l.b16 %v470
    %v491 = vunpack.c.l.b16 %v471
    %v492 = vunpack.c.l.b16 %v472
    %v493 = vunpack.c.l.b16 %v473
    %v494 = vunpack.c.l.b16 %v474
    %v495 = vpack.c.b16 %v488, %v487
    %v496 = vpack.c.b16 %v490, %v489
    %v497 = vpack.c.b16 %v492, %v491
    %v498 = vpack.c.b16 %v494, %v493
    %v504 = vsel %vm137, %v466, 0
    %506 = vmatprep.subr.bf16.mxu0 0
    %507 = vmatpush1.bf16.msra.mxu0 %v495
    %508 = vmatprep.subr.bf16.mxu0 0
    %509 = vmatpush1.bf16.msra.mxu0 %v496
    %510 = vmatprep.subr.bf16.mxu0 0
    %511 = vmatpush1.bf16.msra.mxu0 %v497
    %512 = vmatprep.subr.bf16.mxu0 0
    %513 = vmatpush1.bf16.msra.mxu0 %v498
    %514 = vmatprep.subr.bf16.mxu0 0
    %515 = vmatpush1.bf16.msra.mxu0 0
    %516 = vmatprep.subr.bf16.mxu0 0
    %517 = vmatpush1.bf16.msra.mxu0 0
    %518 = vmatprep.subr.bf16.mxu0 0
    %519 = vmatpush1.bf16.msra.mxu0 0
    %520 = vmatprep.subr.bf16.mxu0 0
    %521 = vmatpush1.bf16.msra.mxu0 0
    %522 = vmatprep.subr.bf16.mxu0 0
    %523 = vmatpush1.bf16.msra.mxu0 0
    %524 = vmatprep.subr.bf16.mxu0 0
    %525 = vmatpush1.bf16.msra.mxu0 0
    %526 = vmatprep.subr.bf16.mxu0 0
    %527 = vmatpush1.bf16.msra.mxu0 0
    %528 = vmatprep.subr.bf16.mxu0 0
    %529 = vmatpush1.bf16.msra.mxu0 0
    %530 = vmatprep.subr.bf16.mxu0 0
    %531 = vmatpush1.bf16.msra.mxu0 0
    %532 = vmatprep.subr.bf16.mxu0 0
    %533 = vmatpush1.bf16.msra.mxu0 0
    %534 = vmatprep.subr.bf16.mxu0 0
    %535 = vmatpush1.bf16.msra.mxu0 0
    %536 = vmatprep.subr.bf16.mxu0 0
    %537 = vmatpush1.bf16.msra.mxu0 0
    %538 = vmatprep.mubr.bf16.mxu0 0
    %539 = vmatmul.mubr.bf16.gmra.mrb[0].mxu0 %v504
    %v540 = vpop.f32.mrb[0].mxu0
    %v541 = vadd.f32 %v478, %v540
    %v542 = vpop.f32.mrb[0].mxu0
    %v543 = vpop.f32.mrb[0].mxu0
    %v544 = vpop.f32.mrb[0].mxu0
    %545 = vdwg.mxu0
    %546 = vst.msk [vmem:[#allocation11] sm:$0xff] %vm137, %v541
    // Predicated region
    $region58: #{tpu_custom_call.1} parent=1 // pred_check
      _
    $region59: #{tpu_custom_call.1} parent=1 // pred_check_branch
      %548 = sbr.rel (0) target = $region61
    $region60: #{tpu_custom_call.1} parent=1 // pred_region
      %s550 = ssub.s32 128, 128
      %551 = vsyncadd [#allocation4], %s550
      %s553 = sshll.u32 [#allocation11], 4
      %s554 = int_to_ptr.vmem [resolvable:$true] %s553
      %556 = dma.vmem_to_hbm [thread:$0]  %s554, 128, %s9, [#allocation4]
    $region61: #{tpu_custom_call.1} parent=1 // pred_fallthru
      _
    // Predicated region
    $region62: #{tpu_custom_call.1} parent=1 // pred_check
      _
    $region63: #{tpu_custom_call.1} parent=1 // pred_check_branch
      %558 = sbr.rel (0) target = $region65
    $region64: #{tpu_custom_call.1} parent=1 // pred_region
      %559 = dma.done [#allocation4], 128
    $region65: #{tpu_custom_call.1} parent=1 // pred_fallthru
      _
    %560 = vsyncpa [#allocation3], 1
    %561 = vsyncpa [#allocation6], 1
    %562 = vsyncpa [#allocation9], 1
    %563 = vsyncpa [#allocation4], 1

</llo_original>
